<compile_context>
chip_gen: v7x
topology: tpu7x:2x2x1
jax: 0.10.0
libtpu: 0.0.40
codegen_flags: <defaults>
</compile_context>

<pallas_src>
import functools

import jax
import jax.numpy as jnp
from jax.experimental import pallas as pl
from jax.experimental.pallas import tpu as pltpu

LEAKY = 0.1  # stands in for args.leaky in the reference code


def _round_up(x, m):
    return ((x + m - 1) // m) * m


def fc_kernel_f32_out(x_ref, w_ref, o_ref, *, leaky):
    """Output-stationary K-reduction; accumulate directly in the f32 output tile."""
    k = pl.program_id(2)

    @pl.when(k == 0)
    def _():
        o_ref[...] = jnp.zeros_like(o_ref)

    o_ref[...] += jnp.dot(
        x_ref[...], w_ref[...], preferred_element_type=jnp.float32
    )

    @pl.when(k == pl.num_programs(2) - 1)
    def _():
        acc = o_ref[...]
        o_ref[...] = jnp.maximum(leaky * acc, acc)


def fc_kernel_scratch(x_ref, w_ref, o_ref, acc_ref, *, leaky):
    """Same reduction, but with an f32 VMEM accumulator (for bf16/fp8 outputs)."""
    k = pl.program_id(2)

    @pl.when(k == 0)
    def _():
        acc_ref[...] = jnp.zeros_like(acc_ref)

    acc_ref[...] += jnp.dot(
        x_ref[...], w_ref[...], preferred_element_type=jnp.float32
    )

    @pl.when(k == pl.num_programs(2) - 1)
    def _():
        acc = acc_ref[...]
        o_ref[...] = jnp.maximum(leaky * acc, acc).astype(o_ref.dtype)


def fc_forward(x, w, *, leaky=LEAKY, tm=None, tn=None, tk=None,
               compute_dtype=None, out_dtype=None):
    """out = LeakyRelu(x @ w).

    x: (M, K), w: (K, N). Optional compute_dtype (e.g. jnp.bfloat16) casts the
    operands before the MXU matmul while keeping f32 accumulation.
    """
    M, K = x.shape
    K2, N = w.shape
    assert K == K2, f"inner dims mismatch: {K} vs {K2}"
    out_dtype = jnp.dtype(out_dtype or x.dtype)

    if compute_dtype is not None:
        x = x.astype(compute_dtype)
        w = w.astype(compute_dtype)

    # --- tile selection: MXU/lane-aligned, small problems -> one lane-dense block
    tm = tm or min(256, _round_up(M, 8))
    tn = tn or min(512, _round_up(N, 128))
    tk = tk or min(512, _round_up(K, 128))
    assert tm % 8 == 0 and tn % 128 == 0 and tk % 128 == 0, (tm, tn, tk)

    # --- pad so every tile is full (zero padding keeps the matmul exact and
    # removes the partial-K-block accumulation hazard; also makes stores
    # lane-dense since Np is a multiple of 128).
    Mp, Np, Kp = _round_up(M, tm), _round_up(N, tn), _round_up(K, tk)
    if (Mp, Kp) != (M, K):
        x = jnp.pad(x, ((0, Mp - M), (0, Kp - K)))
    if (Kp, Np) != (K, N):
        w = jnp.pad(w, ((0, Kp - K), (0, Np - N)))

    grid = (Mp // tm, Np // tn, Kp // tk)

    use_inplace = out_dtype == jnp.dtype(jnp.float32)
    if use_inplace:
        kernel = functools.partial(fc_kernel_f32_out, leaky=leaky)
        scratch_shapes = []
    else:
        kernel = functools.partial(fc_kernel_scratch, leaky=leaky)
        scratch_shapes = [pltpu.VMEM((tm, tn), jnp.float32)]

    # --- VMEM budget: double-buffered x/w/out tiles (+ optional f32 acc), with
    # headroom, never below the 32 MiB scoped default nor above what the
    # smallest-VMEM generation (v7x, 64 MiB physical) can reasonably give.
    in_itemsize = jnp.dtype(x.dtype).itemsize
    out_itemsize = out_dtype.itemsize
    need = (2 * tm * tk * in_itemsize
            + 2 * tk * tn * in_itemsize
            + 2 * tm * tn * out_itemsize
            + (0 if use_inplace else tm * tn * 4))
    vmem_limit = int(min(max(2 * need, 32 << 20), 96 << 20))

    cost = pl.CostEstimate(
        flops=2 * M * N * K,
        transcendentals=0,
        bytes_accessed=(M * K + K * N) * in_itemsize + M * N * out_itemsize,
    )

    out_padded = pl.pallas_call(
        kernel,
        out_shape=jax.ShapeDtypeStruct((Mp, Np), out_dtype),
        grid_spec=pltpu.PrefetchScalarGridSpec(
            num_scalar_prefetch=0,
            grid=grid,
            in_specs=[
                pl.BlockSpec((tm, tk), lambda i, j, k: (i, k)),
                pl.BlockSpec((tk, tn), lambda i, j, k: (k, j)),
            ],
            out_specs=pl.BlockSpec((tm, tn), lambda i, j, k: (i, j)),
            scratch_shapes=scratch_shapes,
        ),
        compiler_params=pltpu.CompilerParams(
            dimension_semantics=("parallel", "parallel", "arbitrary"),
            vmem_limit_bytes=vmem_limit,
        ),
        cost_estimate=cost,
    )(x, w)

    if (Mp, Np) != (M, N):
        out_padded = out_padded[:M, :N]
    return out_padded


def xavier_normal(key, shape, dtype=jnp.float32):
    fan_in, fan_out = shape
    std = (2.0 / (fan_in + fan_out)) ** 0.5
    return std * jax.random.normal(key, shape, dtype=dtype)


if __name__ == "__main__":
    key = jax.random.PRNGKey(0)
    k_x, k_w = jax.random.split(key)

    # Small shapes consistent with the FC module: (batch, inputDim) @ (inputDim, outDim)
    M, inputDim, outDim = 8, 32, 32
    x = jax.random.normal(k_x, (M, inputDim), dtype=jnp.float32)
    w = xavier_normal(k_w, (inputDim, outDim))

    out = fc_forward(x, w)
    out = jax.block_until_ready(out)

    # reference check in plain JAX
    ref = x @ w
    ref = jnp.maximum(LEAKY * ref, ref)
    assert out.shape == (M, outDim)
    assert jnp.allclose(out, ref, atol=1e-5, rtol=1e-5)

    # also exercise a tiled, non-aligned path (partial K / N blocks via padding)
    M2, K2d, N2 = 300, 640, 200
    x2 = jax.random.normal(k_x, (M2, K2d), dtype=jnp.float32)
    w2 = xavier_normal(k_w, (K2d, N2))
    out2 = jax.block_until_ready(fc_forward(x2, w2, tm=128, tn=128, tk=256))
    ref2 = jnp.maximum(LEAKY * (x2 @ w2), x2 @ w2)
    assert out2.shape == (M2, N2)
    assert jnp.allclose(out2, ref2, atol=1e-4, rtol=1e-4)

    print("KERNEL_OK")
</pallas_src>

<mosaic_0001>
module attributes {stable_mosaic.version = 11 : i64} {
  func.func @fc_kernel_f32_out(%arg0: i32, %arg1: i32, %arg2: i32, %arg3: memref<8x128xf32, #tpu.memory_space<vmem>>, %arg4: memref<128x128xf32, #tpu.memory_space<vmem>>, %arg5: memref<8x128xf32, #tpu.memory_space<vmem>>) attributes {dimension_semantics = [#tpu.dimension_semantics<parallel>, #tpu.dimension_semantics<parallel>, #tpu.dimension_semantics<arbitrary>], iteration_bounds = array<i64: 1, 1, 1>, scalar_prefetch = 0 : i64, scratch_operands = 0 : i64, tpu.core_type = #tpu.core_type<tc>, window_params = [{transform_indices = @transform_0, window_bounds = array<i64: 8, 128>}, {transform_indices = @transform_1, window_bounds = array<i64: 128, 128>}, {transform_indices = @transform_2, window_bounds = array<i64: 8, 128>}]} {
    %c0_i32 = arith.constant 0 : i32
    %0 = arith.cmpi eq, %arg2, %c0_i32 : i32
    %1 = arith.extui %0 : i1 to i32
    %c0_i32_0 = arith.constant 0 : i32
    %2 = arith.cmpi ne, %1, %c0_i32_0 : i32
    scf.if %2 {
      %cst_10 = arith.constant 0.000000e+00 : f32
      %12 = vector.broadcast %cst_10 : f32 to vector<8x128xf32>
      %c0_11 = arith.constant 0 : index
      %c0_12 = arith.constant 0 : index
      %13 = vector.load %arg5[%c0_11, %c0_12] : memref<8x128xf32, #tpu.memory_space<vmem>>, vector<8x128xf32>
      tpu.vector_store %arg5[%c0_11, %c0_12], %12 {strides = array<i32>} : memref<8x128xf32, #tpu.memory_space<vmem>>, vector<8x128xf32>,
    } else {
    }
    %c0 = arith.constant 0 : index
    %c0_1 = arith.constant 0 : index
    %3 = vector.load %arg5[%c0, %c0_1] : memref<8x128xf32, #tpu.memory_space<vmem>>, vector<8x128xf32>
    %c0_2 = arith.constant 0 : index
    %c0_3 = arith.constant 0 : index
    %4 = vector.load %arg3[%c0_2, %c0_3] : memref<8x128xf32, #tpu.memory_space<vmem>>, vector<8x128xf32>
    %c0_4 = arith.constant 0 : index
    %c0_5 = arith.constant 0 : index
    %5 = vector.load %arg4[%c0_4, %c0_5] : memref<128x128xf32, #tpu.memory_space<vmem>>, vector<128x128xf32>
    %cst = arith.constant dense<0.000000e+00> : vector<8x128xf32>
    %6 = tpu.matmul %4, %5, %cst {dimension_numbers = #tpu.dot_dimension_numbers<[1], [0], [0], [1], [0, 0, 1, 1], [], []>} : vector<8x128xf32>, vector<128x128xf32>, vector<8x128xf32> -> vector<8x128xf32>
    %7 = arith.addf %3, %6 : vector<8x128xf32>
    %c0_6 = arith.constant 0 : index
    %c0_7 = arith.constant 0 : index
    %8 = vector.load %arg5[%c0_6, %c0_7] : memref<8x128xf32, #tpu.memory_space<vmem>>, vector<8x128xf32>
    tpu.vector_store %arg5[%c0_6, %c0_7], %7 {strides = array<i32>} : memref<8x128xf32, #tpu.memory_space<vmem>>, vector<8x128xf32>,
    %c0_i32_8 = arith.constant 0 : i32
    %9 = arith.cmpi eq, %arg2, %c0_i32_8 : i32
    %10 = arith.extui %9 : i1 to i32
    %c0_i32_9 = arith.constant 0 : i32
    %11 = arith.cmpi ne, %10, %c0_i32_9 : i32
    scf.if %11 {
      %c0_10 = arith.constant 0 : index
      %c0_11 = arith.constant 0 : index
      %12 = vector.load %arg5[%c0_10, %c0_11] : memref<8x128xf32, #tpu.memory_space<vmem>>, vector<8x128xf32>
      %cst_12 = arith.constant 1.000000e-01 : f32
      %13 = vector.broadcast %cst_12 : f32 to vector<8x128xf32>
      %14 = arith.mulf %13, %12 : vector<8x128xf32>
      %15 = arith.maximumf %14, %12 : vector<8x128xf32>
      %c0_13 = arith.constant 0 : index
      %c0_14 = arith.constant 0 : index
      %16 = vector.load %arg5[%c0_13, %c0_14] : memref<8x128xf32, #tpu.memory_space<vmem>>, vector<8x128xf32>
      tpu.vector_store %arg5[%c0_13, %c0_14], %15 {strides = array<i32>} : memref<8x128xf32, #tpu.memory_space<vmem>>, vector<8x128xf32>,
    } else {
    }
    return
  }
  func.func @transform_0(%arg0: i32, %arg1: i32, %arg2: i32) -> (i32, i32) {
    %c0_i32 = arith.constant 0 : i32
    return %arg0, %arg2 : i32, i32
  }
  func.func @transform_1(%arg0: i32, %arg1: i32, %arg2: i32) -> (i32, i32) {
    %c0_i32 = arith.constant 0 : i32
    return %arg2, %arg1 : i32, i32
  }
  func.func @transform_2(%arg0: i32, %arg1: i32, %arg2: i32) -> (i32, i32) {
    %c0_i32 = arith.constant 0 : i32
    return %arg0, %arg1 : i32, i32
  }
}

</mosaic_0001>

<llo_original>
// kernel: tpu_custom_call.1
$region0: #{tpu_custom_call.1}
  #allocation0 [shape = 'u32[]', space=smem, size = 0x4, offset = 0x4, fixed_abs, tag = 'smem constant byte address 0x4 - core index']
  #allocation1 [shape = 'u32[144,128]{1,0:T(1,128)}', space=vmem, size = 0x12000, scoped, tag = 'internal scratch']
  %s0 = inlined_call_operand.hbm [shape: f32[8,128], index: 0, kind: input, shape index: {}]
  %s1 = inlined_call_operand.hbm [shape: f32[128,128], index: 1, kind: input, shape index: {}]
  %s2 = inlined_call_operand.hbm [shape: f32[8,128], index: 2, kind: output, shape index: {}]
  %s3 = sld [smem:[#allocation0]]
  $region34: #{tpu_custom_call.1} parent=0
    _
  %s5 = ssub.s32 1, %s3
  %s6 = scalar_select 0, %s5, %s3
  $region1: #{tpu_custom_call.1} parent=0
    #allocation2 [shape = 'u8[4096]{0}', space=vmem, size = 0x1000, scoped, tag = 'input window, operand 0, single buffered']
    #allocation3 [shape = 's32[1]{0}', space=sflag, size = 0x4, scoped, tag = 'scoped memory for tpu_custom_call.1']
    #allocation4 [shape = 's32[1]{0}', space=sflag, size = 0x4, scoped, tag = 'scoped memory for tpu_custom_call.1']
    #allocation5 [shape = 'u8[65536]{0}', space=vmem, size = 0x10000, scoped, tag = 'input window, operand 1, single buffered']
    #allocation6 [shape = 's32[1]{0}', space=sflag, size = 0x4, scoped, tag = 'scoped memory for tpu_custom_call.1']
    #allocation7 [shape = 'u8[4096]{0}', space=vmem, size = 0x1000, scoped, tag = 'output window, operand 0, single buffered']
    %7 = vsyncpa [#allocation3], 0
    %8 = vsyncpa [#allocation6], 0
    %9 = vsyncpa [#allocation4], 0
    // Predicated region
    $region2: #{tpu_custom_call.1} parent=1 // pred_check
      _
    $region3: #{tpu_custom_call.1} parent=1 // pred_check_branch
      %11 = sbr.rel (0) target = $region5
    $region4: #{tpu_custom_call.1} parent=1 // pred_region
      %s13 = ssub.s32 128, 128
      %14 = vsyncadd [#allocation3], %s13
      %s16 = sshll.u32 [#allocation2], 4
      %s17 = int_to_ptr.vmem [resolvable:$true] %s16
      %19 = dma.hbm_to_vmem [thread:$0]  %s0, 128, %s17, [#allocation3]
    $region5: #{tpu_custom_call.1} parent=1 // pred_fallthru
      _
    // Predicated region
    $region6: #{tpu_custom_call.1} parent=1 // pred_check
      _
    $region7: #{tpu_custom_call.1} parent=1 // pred_check_branch
      %21 = sbr.rel (0) target = $region9
    $region8: #{tpu_custom_call.1} parent=1 // pred_region
      %s23 = ssub.s32 2048, 2048
      %24 = vsyncadd [#allocation6], %s23
      %s25 = sshll.u32 [#allocation5], 4
      %s26 = int_to_ptr.vmem [resolvable:$true] %s25
      %31 = dma.hbm_to_vmem [thread:$0]  %s1, 2048, %s26, [#allocation6], 128, 128, 8
    $region9: #{tpu_custom_call.1} parent=1 // pred_fallthru
      _
    // Predicated region
    $region10: #{tpu_custom_call.1} parent=1 // pred_check
      _
    $region11: #{tpu_custom_call.1} parent=1 // pred_check_branch
      %33 = sbr.rel (0) target = $region13
    $region12: #{tpu_custom_call.1} parent=1 // pred_region
      %34 = dma.done [#allocation3], 128
    $region13: #{tpu_custom_call.1} parent=1 // pred_fallthru
      _
    // Predicated region
    $region14: #{tpu_custom_call.1} parent=1 // pred_check
      _
    $region15: #{tpu_custom_call.1} parent=1 // pred_check_branch
      %36 = sbr.rel (0) target = $region17
    $region16: #{tpu_custom_call.1} parent=1 // pred_region
      %37 = dma.done [#allocation6], 2048
    $region17: #{tpu_custom_call.1} parent=1 // pred_fallthru
      _
    %p38 = scmp.eq.s32.totalorder 0, 0
    // Predicated region
    $region18: #{tpu_custom_call.1} parent=1 // pred_check
      %p39 = pneg %p38
    $region19: #{tpu_custom_call.1} parent=1 // pred_check_branch
      %41 = sbr.rel (%p39) target = $region21
    $region20: #{tpu_custom_call.1} parent=1 // pred_region
      %42 = vst [vmem:[#allocation7] sm:$0xff] 0.0
    $region21: #{tpu_custom_call.1} parent=1 // pred_fallthru
      _
    %v43 = vld [vmem:[#allocation7] sm:$0xff]
    %v44 = vld [vmem:[#allocation2] sm:$0xff]
    %v45 = vld [vmem:[#allocation5] sm:$0xff]
    %v46 = vld [vmem:[#allocation5 + $0x8] sm:$0xff]
    %v47 = vld [vmem:[#allocation5 + $0x10] sm:$0xff]
    %v48 = vld [vmem:[#allocation5 + $0x18] sm:$0xff]
    %v49 = vld [vmem:[#allocation5 + $0x20] sm:$0xff]
    %v50 = vld [vmem:[#allocation5 + $0x28] sm:$0xff]
    %v51 = vld [vmem:[#allocation5 + $0x30] sm:$0xff]
    %v52 = vld [vmem:[#allocation5 + $0x38] sm:$0xff]
    %v53 = vld [vmem:[#allocation5 + $0x40] sm:$0xff]
    %v54 = vld [vmem:[#allocation5 + $0x48] sm:$0xff]
    %v55 = vld [vmem:[#allocation5 + $0x50] sm:$0xff]
    %v56 = vld [vmem:[#allocation5 + $0x58] sm:$0xff]
    %v57 = vld [vmem:[#allocation5 + $0x60] sm:$0xff]
    %v58 = vld [vmem:[#allocation5 + $0x68] sm:$0xff]
    %v59 = vld [vmem:[#allocation5 + $0x70] sm:$0xff]
    %v60 = vld [vmem:[#allocation5 + $0x78] sm:$0xff]
    %61 = vmatprep.subr.mxu0 0.0
    %62 = vmatpush1.msra.mxu0 %v45
    %63 = vmatprep.subr.mxu0 0.0
    %64 = vmatpush1.msra.mxu0 %v46
    %65 = vmatprep.subr.mxu0 0.0
    %66 = vmatpush1.msra.mxu0 %v47
    %67 = vmatprep.subr.mxu0 0.0
    %68 = vmatpush1.msra.mxu0 %v48
    %69 = vmatprep.subr.mxu0 0.0
    %70 = vmatpush1.msra.mxu0 %v49
    %71 = vmatprep.subr.mxu0 0.0
    %72 = vmatpush1.msra.mxu0 %v50
    %73 = vmatprep.subr.mxu0 0.0
    %74 = vmatpush1.msra.mxu0 %v51
    %75 = vmatprep.subr.mxu0 0.0
    %76 = vmatpush1.msra.mxu0 %v52
    %77 = vmatprep.subr.mxu0 0.0
    %78 = vmatpush1.msra.mxu0 %v53
    %79 = vmatprep.subr.mxu0 0.0
    %80 = vmatpush1.msra.mxu0 %v54
    %81 = vmatprep.subr.mxu0 0.0
    %82 = vmatpush1.msra.mxu0 %v55
    %83 = vmatprep.subr.mxu0 0.0
    %84 = vmatpush1.msra.mxu0 %v56
    %85 = vmatprep.subr.mxu0 0.0
    %86 = vmatpush1.msra.mxu0 %v57
    %87 = vmatprep.subr.mxu0 0.0
    %88 = vmatpush1.msra.mxu0 %v58
    %89 = vmatprep.subr.mxu0 0.0
    %90 = vmatpush1.msra.mxu0 %v59
    %91 = vmatprep.subr.mxu0 0.0
    %92 = vmatpush1.msra.mxu0 %v60
    %93 = vmatprep.subr.mxu0 0.0
    %94 = vmatpush1.msra.mxu0 0.0
    %95 = vmatprep.subr.mxu0 0.0
    %96 = vmatpush1.msra.mxu0 0.0
    %97 = vmatprep.subr.mxu0 0.0
    %98 = vmatpush1.msra.mxu0 0.0
    %99 = vmatprep.subr.mxu0 0.0
    %100 = vmatpush1.msra.mxu0 0.0
    %101 = vmatprep.subr.mxu0 0.0
    %102 = vmatpush1.msra.mxu0 0.0
    %103 = vmatprep.subr.mxu0 0.0
    %104 = vmatpush1.msra.mxu0 0.0
    %105 = vmatprep.subr.mxu0 0.0
    %106 = vmatpush1.msra.mxu0 0.0
    %107 = vmatprep.subr.mxu0 0.0
    %108 = vmatpush1.msra.mxu0 0.0
    %109 = vmatprep.subr.mxu0 0.0
    %110 = vmatpush1.msra.mxu0 0.0
    %111 = vmatprep.subr.mxu0 0.0
    %112 = vmatpush1.msra.mxu0 0.0
    %113 = vmatprep.subr.mxu0 0.0
    %114 = vmatpush1.msra.mxu0 0.0
    %115 = vmatprep.subr.mxu0 0.0
    %116 = vmatpush1.msra.mxu0 0.0
    %117 = vmatprep.subr.mxu0 0.0
    %118 = vmatpush1.msra.mxu0 0.0
    %119 = vmatprep.subr.mxu0 0.0
    %120 = vmatpush1.msra.mxu0 0.0
    %121 = vmatprep.subr.mxu0 0.0
    %122 = vmatpush1.msra.mxu0 0.0
    %123 = vmatprep.subr.mxu0 0.0
    %124 = vmatpush1.msra.mxu0 0.0
    %125 = vmatprep.mubr.f32.mxu0 0.0
    %126 = vmatmul.mubr.f32.gmra.mrb[0].mxu0 %v44
    %v127 = vpop.f32.mrb[0].mxu0
    %v128 = vadd.f32 0.0, %v127
    %v129 = vpop.f32.mrb[0].mxu0
    %130 = vdwg.mxu0
    %v131 = vadd.f32 %v43, %v128
    %132 = vst [vmem:[#allocation7] sm:$0xff] %v131
    // Predicated region
    $region22: #{tpu_custom_call.1} parent=1 // pred_check
      %p133 = pneg %p38
    $region23: #{tpu_custom_call.1} parent=1 // pred_check_branch
      %135 = sbr.rel (%p133) target = $region25
    $region24: #{tpu_custom_call.1} parent=1 // pred_region
      %v136 = vld [vmem:[#allocation7] sm:$0xff]
      %v137 = vmul.f32 %v136, 0.1
      %v138 = vmax.f32 %v137, %v136
      %139 = vst [vmem:[#allocation7] sm:$0xff] %v138
    $region25: #{tpu_custom_call.1} parent=1 // pred_fallthru
      _
    // Predicated region
    $region26: #{tpu_custom_call.1} parent=1 // pred_check
      _
    $region27: #{tpu_custom_call.1} parent=1 // pred_check_branch
      %141 = sbr.rel (0) target = $region29
    $region28: #{tpu_custom_call.1} parent=1 // pred_region
      %s143 = ssub.s32 128, 128
      %144 = vsyncadd [#allocation4], %s143
      %s146 = sshll.u32 [#allocation7], 4
      %s147 = int_to_ptr.vmem [resolvable:$true] %s146
      %149 = dma.vmem_to_hbm [thread:$0]  %s147, 128, %s2, [#allocation4]
    $region29: #{tpu_custom_call.1} parent=1 // pred_fallthru
      _
    // Predicated region
    $region30: #{tpu_custom_call.1} parent=1 // pred_check
      _
    $region31: #{tpu_custom_call.1} parent=1 // pred_check_branch
      %151 = sbr.rel (0) target = $region33
    $region32: #{tpu_custom_call.1} parent=1 // pred_region
      %152 = dma.done [#allocation4], 128
    $region33: #{tpu_custom_call.1} parent=1 // pred_fallthru
      _
    %153 = vsyncpa [#allocation3], 1
    %154 = vsyncpa [#allocation6], 1
    %155 = vsyncpa [#allocation4], 1

</llo_original>
